<compile_context>
chip_gen: v5e
topology: v5e:2x2
jax: 0.10.0
libtpu: 0.0.40
codegen_flags: <defaults>
</compile_context>

<pallas_src>
import functools
import math

import jax
import jax.numpy as jnp
import numpy as np
from jax.experimental import pallas as pl
from jax.experimental.pallas import tpu as pltpu

_LANES = 128
_SUBLANES = 8
_DEFAULT_BLOCK_ROWS = 2048      # (2048, 128) f32 = 1 MiB per input block
_PALLAS_MIN_ELEMS = 64 * 1024   # below this, a fused jnp expression is faster


def _round_up(x, m):
    return ((x + m - 1) // m) * m


def _wmse_kernel(pred_ref, truth_ref, w_ref, out_ref, *,
                 block_rows, blocks_per_split, valid_rows):
    """Accumulate a lane-dense (8, 128) partial of weights * (truth - pred)^2."""
    c = pl.program_id(0)            # TensorCore split axis ("parallel")
    i = pl.program_id(1)            # reduction steps within the split ("arbitrary")

    @pl.when(i == 0)
    def _():
        out_ref[...] = jnp.zeros_like(out_ref)

    p = pred_ref[...].astype(jnp.float32)
    t = truth_ref[...].astype(jnp.float32)
    w = w_ref[...].astype(jnp.float32)
    d = t - p
    prod = w * d * d                                    # VPU; kernel is HBM-bound

    # Mask rows past the end of the real slab (partial / clamped boundary blocks).
    blk = c * blocks_per_split + i                      # intended (unclamped) block
    row = blk * block_rows + jax.lax.broadcasted_iota(jnp.int32, prod.shape, 0)
    prod = jnp.where(row < valid_rows, prod, 0.0)

    # Per-block partial reduce: (block_rows, 128) -> (8, 128), tile-aligned.
    out_ref[...] += prod.reshape(-1, _SUBLANES, _LANES).sum(axis=0)


def weighted_mse(pred, truth, weights, *, size_average=True,
                 block_rows=_DEFAULT_BLOCK_ROWS,
                 min_pallas_elems=_PALLAS_MIN_ELEMS):
    assert pred.shape == truth.shape == weights.shape, "shapes must match"
    n = int(math.prod(pred.shape))

    # Tiny inputs: let XLA fuse the whole thing; pallas_call overhead dominates.
    if n < max(int(min_pallas_elems), 1):
        d = truth.astype(jnp.float32) - pred.astype(jnp.float32)
        total = jnp.sum(weights.astype(jnp.float32) * d * d)
        return total / n if size_average else total

    # Flatten (free) and minimally pad to a lane multiple (<= 127 zeros, sum-neutral).
    rem = n % _LANES
    pad = (_LANES - rem) % _LANES

    def prep(x):
        flat = jnp.reshape(x, (-1,))            # native dtype, no full-tile pad
        if pad:
            flat = jnp.pad(flat, (0, pad))
        return flat.reshape(-1, _LANES)

    p2, t2, w2 = prep(pred), prep(truth), prep(weights)
    rows = (n + pad) // _LANES

    # Right-size the block (multiple of the 8-sublane tile), derive the grid.
    blk_rows = max(_SUBLANES, min(int(block_rows), _round_up(rows, _SUBLANES)))
    blk_rows = _round_up(blk_rows, _SUBLANES)
    num_blocks = -(-rows // blk_rows)

    # Two-way split across TensorCores (wins on v7x; harmless on v5e/v6e).
    num_splits = 2 if num_blocks >= 2 else 1
    blocks_per_split = -(-num_blocks // num_splits)

    def in_index_map(c, i):
        # Clamp so over-allocated split blocks stay in bounds; the kernel's row
        # mask zeroes any rows that were not actually requested.
        blk = jnp.minimum(c * blocks_per_split + i, num_blocks - 1)
        return (blk, 0)

    in_spec = pl.BlockSpec((blk_rows, _LANES), in_index_map)
    out_spec = pl.BlockSpec((None, _SUBLANES, _LANES), lambda c, i: (c, 0, 0))

    bytes_in = sum(int(np.dtype(x.dtype).itemsize) * n for x in (pred, truth, weights))
    cost = pl.CostEstimate(
        flops=4 * n,
        transcendentals=0,
        bytes_accessed=bytes_in + num_splits * _SUBLANES * _LANES * 4,
    )

    partials = pl.pallas_call(
        functools.partial(
            _wmse_kernel,
            block_rows=blk_rows,
            blocks_per_split=blocks_per_split,
            valid_rows=rows,
        ),
        out_shape=jax.ShapeDtypeStruct((num_splits, _SUBLANES, _LANES), jnp.float32),
        grid_spec=pltpu.PrefetchScalarGridSpec(
            num_scalar_prefetch=0,
            grid=(num_splits, blocks_per_split),
            in_specs=[in_spec, in_spec, in_spec],
            out_specs=out_spec,
        ),
        compiler_params=pltpu.CompilerParams(
            dimension_semantics=("parallel", "arbitrary"),
        ),
        cost_estimate=cost,
    )(p2, t2, w2)

    total = jnp.sum(partials)   # tiny lane-dense epilogue reduce, fused by XLA
    return total / n if size_average else total


if __name__ == "__main__":
    key = jax.random.PRNGKey(0)
    k1, k2, k3 = jax.random.split(key, 3)

    # Small shape consistent with an LSTM regression setup: (batch, seq, hidden).
    shape = (2, 8, 32)
    pred = jax.random.normal(k1, shape, dtype=jnp.float32)
    truth = jax.random.normal(k2, shape, dtype=jnp.float32)
    weights = jax.random.uniform(k3, shape, dtype=jnp.float32)

    ref_mean = jnp.mean(weights * (truth - pred) ** 2)
    ref_sum = jnp.sum(weights * (truth - pred) ** 2)

    # Force the Pallas path even at this tiny size so the kernel itself runs.
    out_mean = jax.block_until_ready(
        weighted_mse(pred, truth, weights, size_average=True, min_pallas_elems=0))
    out_sum = jax.block_until_ready(
        weighted_mse(pred, truth, weights, size_average=False, min_pallas_elems=0))
    assert np.allclose(np.asarray(out_mean), np.asarray(ref_mean), rtol=1e-5, atol=1e-6)
    assert np.allclose(np.asarray(out_sum), np.asarray(ref_sum), rtol=1e-5, atol=1e-5)

    # Default path falls back to fused jnp for tiny inputs — verify it too.
    out_fb = jax.block_until_ready(weighted_mse(pred, truth, weights))
    assert np.allclose(np.asarray(out_fb), np.asarray(ref_mean), rtol=1e-5, atol=1e-6)

    # Larger ragged shape: exercises the <=127-elem lane pad, multi-block grid,
    # the two-way core split, and the masked partial last block.
    shape2 = (16, 33, 501)   # n = 264528, n % 128 = 80
    pred2 = jax.random.normal(k1, shape2, dtype=jnp.float32)
    truth2 = jax.random.normal(k2, shape2, dtype=jnp.float32)
    weights2 = jax.random.uniform(k3, shape2, dtype=jnp.float32)
    out2 = jax.block_until_ready(weighted_mse(pred2, truth2, weights2, size_average=True))
    ref2 = jnp.mean(weights2 * (truth2 - pred2) ** 2)
    assert np.allclose(np.asarray(out2), np.asarray(ref2), rtol=2e-4, atol=1e-6)

    print("KERNEL_OK")
</pallas_src>

<mosaic_0001>
module attributes {stable_mosaic.version = 11 : i64} {
  func.func @_wmse_kernel(%arg0: i32, %arg1: i32, %arg2: memref<8x128xf32, #tpu.memory_space<vmem>>, %arg3: memref<8x128xf32, #tpu.memory_space<vmem>>, %arg4: memref<8x128xf32, #tpu.memory_space<vmem>>, %arg5: memref<1x8x128xf32, #tpu.memory_space<vmem>>) attributes {dimension_semantics = [#tpu.dimension_semantics<parallel>, #tpu.dimension_semantics<arbitrary>], iteration_bounds = array<i64: 1, 1>, scalar_prefetch = 0 : i64, scratch_operands = 0 : i64, tpu.core_type = #tpu.core_type<tc>, window_params = [{transform_indices = @transform_0, window_bounds = array<i64: 8, 128>}, {transform_indices = @transform_1, window_bounds = array<i64: 8, 128>}, {transform_indices = @transform_2, window_bounds = array<i64: 8, 128>}, {transform_indices = @transform_3, window_bounds = array<i64: 1, 8, 128>}]} {
    %c0_i32 = arith.constant 0 : i32
    %0 = arith.cmpi eq, %arg1, %c0_i32 : i32
    %1 = arith.extui %0 : i1 to i32
    %c0_i32_0 = arith.constant 0 : i32
    %2 = arith.cmpi ne, %1, %c0_i32_0 : i32
    scf.if %2 {
      %cst_13 = arith.constant 0.000000e+00 : f32
      %27 = vector.broadcast %cst_13 : f32 to vector<8x128xf32>
      %c0_14 = arith.constant 0 : index
      %c0_15 = arith.constant 0 : index
      %c0_16 = arith.constant 0 : index
      %28 = vector.load %arg5[%c0_14, %c0_15, %c0_16] : memref<1x8x128xf32, #tpu.memory_space<vmem>>, vector<1x8x128xf32>
      %29 = vector.shape_cast %28 : vector<1x8x128xf32> to vector<8x128xf32>
      %30 = vector.shape_cast %27 : vector<8x128xf32> to vector<1x8x128xf32>
      tpu.vector_store %arg5[%c0_14, %c0_15, %c0_16], %30 {strides = array<i32>} : memref<1x8x128xf32, #tpu.memory_space<vmem>>, vector<1x8x128xf32>,
    } else {
    }
    %c0 = arith.constant 0 : index
    %c0_1 = arith.constant 0 : index
    %3 = vector.load %arg2[%c0, %c0_1] : memref<8x128xf32, #tpu.memory_space<vmem>>, vector<8x128xf32>
    %c0_2 = arith.constant 0 : index
    %c0_3 = arith.constant 0 : index
    %4 = vector.load %arg3[%c0_2, %c0_3] : memref<8x128xf32, #tpu.memory_space<vmem>>, vector<8x128xf32>
    %c0_4 = arith.constant 0 : index
    %c0_5 = arith.constant 0 : index
    %5 = vector.load %arg4[%c0_4, %c0_5] : memref<8x128xf32, #tpu.memory_space<vmem>>, vector<8x128xf32>
    %6 = arith.subf %4, %3 : vector<8x128xf32>
    %7 = arith.mulf %5, %6 : vector<8x128xf32>
    %8 = arith.mulf %7, %6 : vector<8x128xf32>
    %c1_i32 = arith.constant 1 : i32
    %9 = arith.muli %arg0, %c1_i32 : i32
    %10 = arith.addi %9, %arg1 : i32
    %c8_i32 = arith.constant 8 : i32
    %11 = arith.muli %10, %c8_i32 : i32
    %12 = tpu.iota {dimensions = array<i32: 0>} : vector<8x128xi32>
    %13 = vector.broadcast %11 : i32 to vector<8x128xi32>
    %14 = arith.addi %13, %12 : vector<8x128xi32>
    %c4_i32 = arith.constant 4 : i32
    %15 = vector.broadcast %c4_i32 : i32 to vector<8x128xi32>
    %16 = arith.cmpi slt, %14, %15 : vector<8x128xi32>
    %cst = arith.constant 0.000000e+00 : f32
    %17 = vector.broadcast %cst : f32 to vector<8x128xf32>
    %18 = arith.select %16, %8, %17 : vector<8x128xi1>, vector<8x128xf32>
    %c0_6 = arith.constant 0 : index
    %c0_7 = arith.constant 0 : index
    %c0_8 = arith.constant 0 : index
    %19 = vector.load %arg5[%c0_6, %c0_7, %c0_8] : memref<1x8x128xf32, #tpu.memory_space<vmem>>, vector<1x8x128xf32>
    %20 = vector.shape_cast %19 : vector<1x8x128xf32> to vector<8x128xf32>
    %21 = vector.shape_cast %18 : vector<8x128xf32> to vector<1x8x128xf32>
    %cst_9 = arith.constant dense<0.000000e+00> : vector<8x128xf32>
    %22 = vector.multi_reduction <add>, %21, %cst_9 [0] : vector<1x8x128xf32> to vector<8x128xf32>
    %23 = arith.addf %20, %22 : vector<8x128xf32>
    %c0_10 = arith.constant 0 : index
    %c0_11 = arith.constant 0 : index
    %c0_12 = arith.constant 0 : index
    %24 = vector.load %arg5[%c0_10, %c0_11, %c0_12] : memref<1x8x128xf32, #tpu.memory_space<vmem>>, vector<1x8x128xf32>
    %25 = vector.shape_cast %24 : vector<1x8x128xf32> to vector<8x128xf32>
    %26 = vector.shape_cast %23 : vector<8x128xf32> to vector<1x8x128xf32>
    tpu.vector_store %arg5[%c0_10, %c0_11, %c0_12], %26 {strides = array<i32>} : memref<1x8x128xf32, #tpu.memory_space<vmem>>, vector<1x8x128xf32>,
    return
  }
  func.func @transform_0(%arg0: i32, %arg1: i32) -> (i32, i32) {
    %c1_i32 = arith.constant 1 : i32
    %0 = arith.muli %arg0, %c1_i32 : i32
    %1 = arith.addi %0, %arg1 : i32
    %c0_i32 = arith.constant 0 : i32
    %2 = arith.minsi %1, %c0_i32 : i32
    %c0_i32_0 = arith.constant 0 : i32
    %c0_i32_1 = arith.constant 0 : i32
    return %2, %c0_i32_0 : i32, i32
  }
  func.func @transform_1(%arg0: i32, %arg1: i32) -> (i32, i32) {
    %c1_i32 = arith.constant 1 : i32
    %0 = arith.muli %arg0, %c1_i32 : i32
    %1 = arith.addi %0, %arg1 : i32
    %c0_i32 = arith.constant 0 : i32
    %2 = arith.minsi %1, %c0_i32 : i32
    %c0_i32_0 = arith.constant 0 : i32
    %c0_i32_1 = arith.constant 0 : i32
    return %2, %c0_i32_0 : i32, i32
  }
  func.func @transform_2(%arg0: i32, %arg1: i32) -> (i32, i32) {
    %c1_i32 = arith.constant 1 : i32
    %0 = arith.muli %arg0, %c1_i32 : i32
    %1 = arith.addi %0, %arg1 : i32
    %c0_i32 = arith.constant 0 : i32
    %2 = arith.minsi %1, %c0_i32 : i32
    %c0_i32_0 = arith.constant 0 : i32
    %c0_i32_1 = arith.constant 0 : i32
    return %2, %c0_i32_0 : i32, i32
  }
  func.func @transform_3(%arg0: i32, %arg1: i32) -> (i32, i32, i32) {
    %c0_i32 = arith.constant 0 : i32
    %c0_i32_0 = arith.constant 0 : i32
    %c0_i32_1 = arith.constant 0 : i32
    return %arg0, %c0_i32, %c0_i32_0 : i32, i32, i32
  }
}

</mosaic_0001>

<llo_original>
// kernel: tpu_custom_call.1
$region0: #{tpu_custom_call.1}
  #allocation0 [shape = 'u32[]', space=smem, size = 0x4, offset = 0x4, fixed_abs, tag = 'smem constant byte address 0x4 - core index']
  #allocation1 [shape = 'u32[72,128]{1,0:T(1,128)}', space=vmem, size = 0x9000, scoped, tag = 'internal scratch']
  %s0 = inlined_call_operand.hbm [shape: f32[4,128], index: 0, kind: input, shape index: {}]
  %s1 = inlined_call_operand.hbm [shape: f32[4,128], index: 1, kind: input, shape index: {}]
  %s2 = inlined_call_operand.hbm [shape: f32[4,128], index: 2, kind: input, shape index: {}]
  %s3 = inlined_call_operand.hbm [shape: f32[1,8,128], index: 3, kind: output, shape index: {}]
  %s4 = sld [smem:[#allocation0]]
  $region38: #{tpu_custom_call.1} parent=0
    _
  %s6 = ssub.s32 1, %s4
  %s7 = scalar_select 0, %s6, %s4
  $region1: #{tpu_custom_call.1} parent=0
    #allocation2 [shape = 'u8[4096]{0}', space=vmem, size = 0x1000, scoped, tag = 'input window, operand 0, single buffered']
    #allocation3 [shape = 's32[1]{0}', space=sflag, size = 0x4, scoped, tag = 'scoped memory for tpu_custom_call.1']
    #allocation4 [shape = 's32[1]{0}', space=sflag, size = 0x4, scoped, tag = 'scoped memory for tpu_custom_call.1']
    #allocation5 [shape = 'u8[4096]{0}', space=vmem, size = 0x1000, scoped, tag = 'input window, operand 1, single buffered']
    #allocation6 [shape = 's32[1]{0}', space=sflag, size = 0x4, scoped, tag = 'scoped memory for tpu_custom_call.1']
    #allocation7 [shape = 'u8[4096]{0}', space=vmem, size = 0x1000, scoped, tag = 'input window, operand 2, single buffered']
    #allocation8 [shape = 'u8[4096]{0}', space=vmem, size = 0x1000, scoped, tag = 'output window, operand 0, single buffered']
    %8 = vsyncpa [#allocation3], 0
    %9 = vsyncpa [#allocation6], 0
    %10 = vsyncpa [#allocation4], 0
    // Predicated region
    $region2: #{tpu_custom_call.1} parent=1 // pred_check
      _
    $region3: #{tpu_custom_call.1} parent=1 // pred_check_branch
      %12 = sbr.rel (0) target = $region5
    $region4: #{tpu_custom_call.1} parent=1 // pred_region
      %s13 = sadd.s32 0, 0
      %p14 = scmp.lt.s32.totalorder %s13, 0
      %s15 = scalar_select %p14, %s13, 0
      %s16 = smul.u32 2, %s15
      %s17 = ssub.s32 1, %s16
      %s18 = smul.u32 4, %s17
      %s19 = ssub.s32 8, %s18
      %s20 = sshll.u32 %s19, 4
      %21 = vsyncadd [#allocation3], %s20
      %p22 = scmp.ne.s32.totalorder 0, %s18
      %s23 = smul.addr %s16, 4
      %s24 = scalar_lea.hbm %s0, %s23
      %s25 = smul.u32 4, %s17
      %s26 = sshll.u32 %s24, 4
      %s27 = int_to_ptr.hbm [resolvable:$true] %s26
      %s28 = sshll.u32 [#allocation2], 4
      %s29 = int_to_ptr.vmem [resolvable:$true] %s28
      %s30 = sshll.u32 %s25, 4
      %34 = dma.hbm_to_vmem [thread:$0]  (%p22), %s27, %s30, %s29, [#allocation3], 64, 64, 4
    $region5: #{tpu_custom_call.1} parent=1 // pred_fallthru
      _
    // Predicated region
    $region6: #{tpu_custom_call.1} parent=1 // pred_check
      _
    $region7: #{tpu_custom_call.1} parent=1 // pred_check_branch
      %36 = sbr.rel (0) target = $region9
    $region8: #{tpu_custom_call.1} parent=1 // pred_region
      %s37 = sadd.s32 0, 0
      %p38 = scmp.lt.s32.totalorder %s37, 0
      %s39 = scalar_select %p38, %s37, 0
      %s40 = smul.u32 2, %s39
      %s41 = ssub.s32 1, %s40
      %s42 = smul.u32 4, %s41
      %s43 = ssub.s32 8, %s42
      %s44 = sshll.u32 %s43, 4
      %45 = vsyncadd [#allocation6], %s44
      %p46 = scmp.ne.s32.totalorder 0, %s42
      %s47 = smul.addr %s40, 4
      %s48 = scalar_lea.hbm %s1, %s47
      %s49 = smul.u32 4, %s41
      %s50 = sshll.u32 %s48, 4
      %s51 = int_to_ptr.hbm [resolvable:$true] %s50
      %s52 = sshll.u32 [#allocation5], 4
      %s53 = int_to_ptr.vmem [resolvable:$true] %s52
      %s54 = sshll.u32 %s49, 4
      %58 = dma.hbm_to_vmem [thread:$0]  (%p46), %s51, %s54, %s53, [#allocation6], 64, 64, 4
    $region9: #{tpu_custom_call.1} parent=1 // pred_fallthru
      _
    // Predicated region
    $region10: #{tpu_custom_call.1} parent=1 // pred_check
      _
    $region11: #{tpu_custom_call.1} parent=1 // pred_check_branch
      %60 = sbr.rel (0) target = $region13
    $region12: #{tpu_custom_call.1} parent=1 // pred_region
      %s61 = sadd.s32 0, 0
      %p62 = scmp.lt.s32.totalorder %s61, 0
      %s63 = scalar_select %p62, %s61, 0
      %s64 = smul.u32 2, %s63
      %s65 = ssub.s32 1, %s64
      %s66 = smul.u32 4, %s65
      %s67 = ssub.s32 8, %s66
      %s68 = sshll.u32 %s67, 4
      %69 = vsyncadd [#allocation6], %s68
      %p70 = scmp.ne.s32.totalorder 0, %s66
      %s71 = smul.addr %s64, 4
      %s72 = scalar_lea.hbm %s2, %s71
      %s73 = smul.u32 4, %s65
      %s74 = sshll.u32 %s72, 4
      %s75 = int_to_ptr.hbm [resolvable:$true] %s74
      %s76 = sshll.u32 [#allocation7], 4
      %s77 = int_to_ptr.vmem [resolvable:$true] %s76
      %s78 = sshll.u32 %s73, 4
      %82 = dma.hbm_to_vmem [thread:$0]  (%p70), %s75, %s78, %s77, [#allocation6], 64, 64, 4
    $region13: #{tpu_custom_call.1} parent=1 // pred_fallthru
      _
    // Predicated region
    $region14: #{tpu_custom_call.1} parent=1 // pred_check
      _
    $region15: #{tpu_custom_call.1} parent=1 // pred_check_branch
      %84 = sbr.rel (0) target = $region17
    $region16: #{tpu_custom_call.1} parent=1 // pred_region
      %86 = dma.done [#allocation3], 128
    $region17: #{tpu_custom_call.1} parent=1 // pred_fallthru
      _
    // Predicated region
    $region18: #{tpu_custom_call.1} parent=1 // pred_check
      _
    $region19: #{tpu_custom_call.1} parent=1 // pred_check_branch
      %88 = sbr.rel (0) target = $region21
    $region20: #{tpu_custom_call.1} parent=1 // pred_region
      %90 = dma.done [#allocation6], 128
    $region21: #{tpu_custom_call.1} parent=1 // pred_fallthru
      _
    // Predicated region
    $region22: #{tpu_custom_call.1} parent=1 // pred_check
      _
    $region23: #{tpu_custom_call.1} parent=1 // pred_check_branch
      %92 = sbr.rel (0) target = $region25
    $region24: #{tpu_custom_call.1} parent=1 // pred_region
      %94 = dma.done [#allocation6], 128
    $region25: #{tpu_custom_call.1} parent=1 // pred_fallthru
      _
    %s95 = sadd.s32 0, 0
    %p96 = scmp.lt.s32.totalorder %s95, 0
    %s97 = scalar_select %p96, %s95, 0
    %s98 = smul.u32 2, %s97
    %s99 = ssub.s32 1, %s98
    %s100 = smul.u32 4, %s99
    %s101 = sadd.s32 0, 0
    %p102 = scmp.lt.s32.totalorder %s101, 0
    %s103 = scalar_select %p102, %s101, 0
    %s104 = smul.u32 2, %s103
    %s105 = ssub.s32 1, %s104
    %s106 = smul.u32 4, %s105
    %s107 = sadd.s32 0, 0
    %p108 = scmp.lt.s32.totalorder %s107, 0
    %s109 = scalar_select %p108, %s107, 0
    %s110 = smul.u32 2, %s109
    %s111 = ssub.s32 1, %s110
    %s112 = smul.u32 4, %s111
    %p113 = scmp.eq.s32.totalorder 0, 0
    // Predicated region
    $region26: #{tpu_custom_call.1} parent=1 // pred_check
      %p114 = pneg %p113
    $region27: #{tpu_custom_call.1} parent=1 // pred_check_branch
      %116 = sbr.rel (%p114) target = $region29
    $region28: #{tpu_custom_call.1} parent=1 // pred_region
      %117 = vst [vmem:[#allocation8] sm:$0xff] 0.0
    $region29: #{tpu_custom_call.1} parent=1 // pred_fallthru
      _
    %v118 = vld [vmem:[#allocation2] sm:$0xff]
    %v119 = vld [vmem:[#allocation5] sm:$0xff]
    %v120 = vld [vmem:[#allocation7] sm:$0xff]
    %v121 = vsub.f32 %v119, %v118
    %v122 = vmul.f32 %v120, %v121
    %v123 = vmul.f32 %v122, %v121
    %s124 = sadd.s32 0, 0
    %s125 = smul.u32 %s124, 8
    %v126 = vlaneseq
    %v127 = vshrl.u32 %v126, 7
    %v128 = vstv %s125
    %v129 = vadd.s32 %v128, %v127
    %vm130 = vcmp.lt.s32.totalorder %v129, 4
    %v131 = vsel %vm130, %v123, 0.0
    %v132 = vld [vmem:[#allocation8] sm:$0xff]
    %v133 = vadd.f32 %v131, 0.0
    %v134 = vadd.f32 %v132, %v133
    %135 = vst [vmem:[#allocation8] sm:$0xff] %v134
    // Predicated region
    $region30: #{tpu_custom_call.1} parent=1 // pred_check
      _
    $region31: #{tpu_custom_call.1} parent=1 // pred_check_branch
      %137 = sbr.rel (0) target = $region33
    $region32: #{tpu_custom_call.1} parent=1 // pred_region
      %139 = vsyncadd [#allocation4], 0
      %s141 = sshll.u32 [#allocation8], 4
      %s142 = int_to_ptr.vmem [resolvable:$true] %s141
      %s143 = sshll.u32 %s3, 4
      %s144 = int_to_ptr.hbm [resolvable:$true] %s143
      %146 = dma.vmem_to_hbm [thread:$0]  %s142, 128, %s144, [#allocation4]
    $region33: #{tpu_custom_call.1} parent=1 // pred_fallthru
      _
    // Predicated region
    $region34: #{tpu_custom_call.1} parent=1 // pred_check
      _
    $region35: #{tpu_custom_call.1} parent=1 // pred_check_branch
      %148 = sbr.rel (0) target = $region37
    $region36: #{tpu_custom_call.1} parent=1 // pred_region
      %150 = dma.done [#allocation4], 128
    $region37: #{tpu_custom_call.1} parent=1 // pred_fallthru
      _
    %151 = vsyncpa [#allocation3], 1
    %152 = vsyncpa [#allocation6], 1
    %153 = vsyncpa [#allocation4], 1

</llo_original>
